<compile_context>
chip_gen: v7x
topology: tpu7x:2x2x1
jax: 0.10.0
libtpu: 0.0.40
codegen_flags: <defaults>
</compile_context>

<pallas_src>
import jax
import jax.numpy as jnp
from jax.experimental import pallas as pl
from jax.experimental.pallas import tpu as pltpu

_NEG_INF = -1e30  # finite "minus infinity" for padded class columns


def _round_up(a, b):
    return (a + b - 1) // b * b


def _logreg_kernel(x_ref, w_ref, b_ref, logits_ref, probs_ref):
    # x_ref: (tm, Fp) row tile; w_ref: (Fp, Cp) resident weight; b_ref: (1, Cp)
    logits = jnp.dot(x_ref[...], w_ref[...],
                     preferred_element_type=jnp.float32) + b_ref[...]
    logits_ref[...] = logits.astype(logits_ref.dtype)

    # Numerically stable softmax over the (padded) class axis; padded classes
    # have logit ~ -1e30 so exp() underflows to 0 and they do not contribute.
    m = jnp.max(logits, axis=1, keepdims=True)
    e = jnp.exp(logits - m)
    denom = jnp.sum(e, axis=1, keepdims=True)
    probs_ref[...] = (e * pl.reciprocal(denom, approx=True)).astype(probs_ref.dtype)


def multiclass_logistic_regression(x, weight, bias, *, tm=512):
    """Returns (logits, probs) = (x @ weight.T + bias, softmax(logits, axis=1)).

    x: (N, F) ; weight: (C, F) (torch nn.Linear layout) ; bias: (C,).
    """
    N, F = x.shape
    C = weight.shape[0]

    # ---- padded, lane-aligned problem sizes --------------------------------
    tm = min(int(tm), _round_up(N, 8))          # row tile, multiple of 8
    Np = _round_up(N, tm)                       # padded rows (grid = Np // tm)
    Fp = _round_up(F, 128)                      # lane-aligned feature dim
    Cp = _round_up(C, 128)                      # lane-dense class dim

    x_p = jnp.pad(x.astype(jnp.float32), ((0, Np - N), (0, Fp - F)))
    w_t = jnp.pad(weight.astype(jnp.float32).T, ((0, Fp - F), (0, Cp - C)))
    b_p = jnp.full((1, Cp), _NEG_INF, jnp.float32).at[0, :C].set(
        bias.astype(jnp.float32))

    # ---- explicit VMEM budget (double-buffered tiles + resident weight) ----
    vmem_bytes = (2 * tm * Fp * 4            # x tile, 2 pipeline buffers
                  + 2 * Fp * Cp * 4          # weight
                  + 2 * 8 * Cp * 4           # bias (sublane-padded)
                  + 2 * 2 * tm * Cp * 4)     # logits + probs tiles
    vmem_limit = int(min(max(2 * vmem_bytes, 32 * 1024 * 1024),
                         56 * 1024 * 1024))

    grid = (Np // tm,)
    out_shapes = (
        jax.ShapeDtypeStruct((Np, Cp), jnp.float32),   # logits (padded)
        jax.ShapeDtypeStruct((Np, Cp), jnp.float32),   # probs  (padded)
    )

    logits_p, probs_p = pl.pallas_call(
        _logreg_kernel,
        out_shape=out_shapes,
        grid_spec=pltpu.PrefetchScalarGridSpec(
            num_scalar_prefetch=0,
            grid=grid,
            in_specs=[
                pl.BlockSpec((tm, Fp), lambda i: (i, 0)),   # x row tile
                pl.BlockSpec((Fp, Cp), lambda i: (0, 0)),   # full weight
                pl.BlockSpec((1, Cp), lambda i: (0, 0)),    # bias
            ],
            out_specs=[
                pl.BlockSpec((tm, Cp), lambda i: (i, 0)),
                pl.BlockSpec((tm, Cp), lambda i: (i, 0)),
            ],
        ),
        compiler_params=pltpu.CompilerParams(
            dimension_semantics=("parallel",),
            vmem_limit_bytes=vmem_limit,
        ),
    )(x_p, w_t, b_p)

    # strip row / class padding
    return logits_p[:N, :C], probs_p[:N, :C]


if __name__ == "__main__":
    # Small shapes consistent with the module: a batch of node features.
    N, n_features, n_classes = 8, 32, 8

    key = jax.random.PRNGKey(0)
    kx, kw, kb = jax.random.split(key, 3)

    # Deterministic nn.Linear-style init: U(-1/sqrt(fan_in), 1/sqrt(fan_in))
    bound = 1.0 / (n_features ** 0.5)
    weight = jax.random.uniform(kw, (n_classes, n_features), jnp.float32,
                                minval=-bound, maxval=bound)
    bias = jax.random.uniform(kb, (n_classes,), jnp.float32,
                              minval=-bound, maxval=bound)
    x = jax.random.normal(kx, (N, n_features), jnp.float32)

    logits, probs = multiclass_logistic_regression(x, weight, bias)
    jax.block_until_ready((logits, probs))

    # Sanity check against plain JAX reference.
    ref_logits = x @ weight.T + bias
    ref_probs = jax.nn.softmax(ref_logits, axis=1)
    assert logits.shape == (N, n_classes) and probs.shape == (N, n_classes)
    assert jnp.allclose(logits, ref_logits, atol=1e-5, rtol=1e-5)
    assert jnp.allclose(probs, ref_probs, atol=1e-3, rtol=1e-3)

    # Second case: ragged N + multi-step grid to exercise padding/pipelining.
    N2 = 300
    x2 = jax.random.normal(jax.random.PRNGKey(1), (N2, n_features), jnp.float32)
    logits2, probs2 = multiclass_logistic_regression(x2, weight, bias, tm=128)
    jax.block_until_ready((logits2, probs2))
    ref_logits2 = x2 @ weight.T + bias
    ref_probs2 = jax.nn.softmax(ref_logits2, axis=1)
    assert logits2.shape == (N2, n_classes) and probs2.shape == (N2, n_classes)
    assert jnp.allclose(logits2, ref_logits2, atol=1e-4, rtol=1e-4)
    assert jnp.allclose(probs2, ref_probs2, atol=1e-3, rtol=1e-3)

    print("KERNEL_OK")
</pallas_src>

<mosaic_0001>
module attributes {stable_mosaic.version = 11 : i64} {
  func.func @_logreg_kernel(%arg0: i32, %arg1: memref<8x128xf32, #tpu.memory_space<vmem>>, %arg2: memref<128x128xf32, #tpu.memory_space<vmem>>, %arg3: memref<1x128xf32, #tpu.memory_space<vmem>>, %arg4: memref<8x128xf32, #tpu.memory_space<vmem>>, %arg5: memref<8x128xf32, #tpu.memory_space<vmem>>) attributes {dimension_semantics = [#tpu.dimension_semantics<parallel>], iteration_bounds = array<i64: 1>, scalar_prefetch = 0 : i64, scratch_operands = 0 : i64, tpu.core_type = #tpu.core_type<tc>, window_params = [{transform_indices = @transform_0, window_bounds = array<i64: 8, 128>}, {pipeline_mode = #tpu.pipeline_mode<synchronous>, transform_indices = @transform_1, window_bounds = array<i64: 128, 128>}, {pipeline_mode = #tpu.pipeline_mode<synchronous>, transform_indices = @transform_2, window_bounds = array<i64: 1, 128>}, {transform_indices = @transform_3, window_bounds = array<i64: 8, 128>}, {transform_indices = @transform_4, window_bounds = array<i64: 8, 128>}]} {
    %c0 = arith.constant 0 : index
    %c0_0 = arith.constant 0 : index
    %0 = vector.load %arg1[%c0, %c0_0] : memref<8x128xf32, #tpu.memory_space<vmem>>, vector<8x128xf32>
    %c0_1 = arith.constant 0 : index
    %c0_2 = arith.constant 0 : index
    %1 = vector.load %arg2[%c0_1, %c0_2] : memref<128x128xf32, #tpu.memory_space<vmem>>, vector<128x128xf32>
    %cst = arith.constant dense<0.000000e+00> : vector<8x128xf32>
    %2 = tpu.matmul %0, %1, %cst {dimension_numbers = #tpu.dot_dimension_numbers<[1], [0], [0], [1], [0, 0, 1, 1], [], []>} : vector<8x128xf32>, vector<128x128xf32>, vector<8x128xf32> -> vector<8x128xf32>
    %c0_3 = arith.constant 0 : index
    %c0_4 = arith.constant 0 : index
    %3 = vector.load %arg3[%c0_3, %c0_4] : memref<1x128xf32, #tpu.memory_space<vmem>>, vector<1x128xf32>
    %4 = vector.broadcast %3 : vector<1x128xf32> to vector<8x128xf32>
    %5 = arith.addf %2, %4 : vector<8x128xf32>
    %c0_5 = arith.constant 0 : index
    %c0_6 = arith.constant 0 : index
    %6 = vector.load %arg4[%c0_5, %c0_6] : memref<8x128xf32, #tpu.memory_space<vmem>>, vector<8x128xf32>
    tpu.vector_store %arg4[%c0_5, %c0_6], %5 {strides = array<i32>} : memref<8x128xf32, #tpu.memory_space<vmem>>, vector<8x128xf32>,
    %cst_7 = arith.constant dense<0xFF800000> : vector<8xf32>
    %7 = vector.multi_reduction <maximumf>, %5, %cst_7 [1] : vector<8x128xf32> to vector<8xf32>
    %8 = vector.shape_cast %7 : vector<8xf32> to vector<8x1xf32>
    %9 = vector.broadcast %8 : vector<8x1xf32> to vector<8x128xf32>
    %10 = arith.subf %5, %9 : vector<8x128xf32>
    %11 = math.exp %10 : vector<8x128xf32>
    %cst_8 = arith.constant dense<0.000000e+00> : vector<8xf32>
    %12 = vector.multi_reduction <add>, %11, %cst_8 [1] : vector<8x128xf32> to vector<8xf32>
    %13 = vector.shape_cast %12 : vector<8xf32> to vector<8x1xf32>
    %14 = tpu.reciprocal %13 {approx = true} : vector<8x1xf32> -> vector<8x1xf32>
    %15 = vector.broadcast %14 : vector<8x1xf32> to vector<8x128xf32>
    %16 = arith.mulf %11, %15 : vector<8x128xf32>
    %c0_9 = arith.constant 0 : index
    %c0_10 = arith.constant 0 : index
    %17 = vector.load %arg5[%c0_9, %c0_10] : memref<8x128xf32, #tpu.memory_space<vmem>>, vector<8x128xf32>
    tpu.vector_store %arg5[%c0_9, %c0_10], %16 {strides = array<i32>} : memref<8x128xf32, #tpu.memory_space<vmem>>, vector<8x128xf32>,
    return
  }
  func.func @transform_0(%arg0: i32) -> (i32, i32) {
    %c0_i32 = arith.constant 0 : i32
    %c0_i32_0 = arith.constant 0 : i32
    return %arg0, %c0_i32 : i32, i32
  }
  func.func @transform_1(%arg0: i32) -> (i32, i32) {
    %c0_i32 = arith.constant 0 : i32
    %c0_i32_0 = arith.constant 0 : i32
    %c0_i32_1 = arith.constant 0 : i32
    return %c0_i32, %c0_i32_0 : i32, i32
  }
  func.func @transform_2(%arg0: i32) -> (i32, i32) {
    %c0_i32 = arith.constant 0 : i32
    %c0_i32_0 = arith.constant 0 : i32
    %c0_i32_1 = arith.constant 0 : i32
    return %c0_i32, %c0_i32_0 : i32, i32
  }
  func.func @transform_3(%arg0: i32) -> (i32, i32) {
    %c0_i32 = arith.constant 0 : i32
    %c0_i32_0 = arith.constant 0 : i32
    return %arg0, %c0_i32 : i32, i32
  }
  func.func @transform_4(%arg0: i32) -> (i32, i32) {
    %c0_i32 = arith.constant 0 : i32
    %c0_i32_0 = arith.constant 0 : i32
    return %arg0, %c0_i32 : i32, i32
  }
}

</mosaic_0001>

<llo_original>
// kernel: tpu_custom_call.1
$region0: #{tpu_custom_call.1}
  #allocation0 [shape = 'u32[]', space=smem, size = 0x4, offset = 0x4, fixed_abs, tag = 'smem constant byte address 0x4 - core index']
  #allocation1 [shape = 'u32[144,128]{1,0:T(1,128)}', space=vmem, size = 0x12000, scoped, tag = 'internal scratch']
  %s0 = inlined_call_operand.hbm [shape: f32[8,128], index: 0, kind: input, shape index: {}]
  %s1 = inlined_call_operand.hbm [shape: f32[128,128], index: 1, kind: input, shape index: {}]
  %s2 = inlined_call_operand.vmem [shape: f32[1,128], index: 2, kind: input, shape index: {}]
  %s3 = inlined_call_operand.hbm [shape: f32[8,128], index: 3, kind: output, shape index: {0}]
  %s4 = inlined_call_operand.hbm [shape: f32[8,128], index: 4, kind: output, shape index: {1}]
  %5 = xla_tuple %s3, %s4
  %s6 = sld [smem:[#allocation0]]
  $region38: #{tpu_custom_call.1} parent=0
    _
  %s8 = ssub.s32 1, %s6
  %s9 = scalar_select 0, %s8, %s6
  $region1: #{tpu_custom_call.1} parent=0
    #allocation2 [shape = 'u8[4096]{0}', space=vmem, size = 0x1000, scoped, tag = 'input window, operand 0, single buffered']
    #allocation3 [shape = 's32[1]{0}', space=sflag, size = 0x4, scoped, tag = 'scoped memory for tpu_custom_call.1']
    #allocation4 [shape = 's32[1]{0}', space=sflag, size = 0x4, scoped, tag = 'scoped memory for tpu_custom_call.1']
    #allocation5 [shape = 'u8[65536]{0}', space=vmem, size = 0x10000, scoped, tag = 'input window, operand 1, single buffered']
    #allocation6 [shape = 's32[1]{0}', space=sflag, size = 0x4, scoped, tag = 'scoped memory for tpu_custom_call.1']
    #allocation7 [shape = 'u8[4096]{0}', space=vmem, size = 0x1000, scoped, tag = 'output window, operand 0, single buffered']
    #allocation8 [shape = 'u8[4096]{0}', space=vmem, size = 0x1000, scoped, tag = 'output window, operand 1, single buffered']
    #allocation9 [shape = 's32[1]{0}', space=sflag, size = 0x4, scoped, tag = 'scoped memory for tpu_custom_call.1']
    %10 = vsyncpa [#allocation3], 0
    %11 = vsyncpa [#allocation6], 0
    %12 = vsyncpa [#allocation4], 0
    %13 = vsyncpa [#allocation9], 0
    // Predicated region
    $region2: #{tpu_custom_call.1} parent=1 // pred_check
      _
    $region3: #{tpu_custom_call.1} parent=1 // pred_check_branch
      %15 = sbr.rel (0) target = $region5
    $region4: #{tpu_custom_call.1} parent=1 // pred_region
      %s17 = ssub.s32 128, 128
      %18 = vsyncadd [#allocation3], %s17
      %s20 = sshll.u32 [#allocation2], 4
      %s21 = int_to_ptr.vmem [resolvable:$true] %s20
      %23 = dma.hbm_to_vmem [thread:$0]  %s0, 128, %s21, [#allocation3]
    $region5: #{tpu_custom_call.1} parent=1 // pred_fallthru
      _
    // Predicated region
    $region6: #{tpu_custom_call.1} parent=1 // pred_check
      _
    $region7: #{tpu_custom_call.1} parent=1 // pred_check_branch
      %25 = sbr.rel (0) target = $region9
    $region8: #{tpu_custom_call.1} parent=1 // pred_region
      %s27 = ssub.s32 2048, 2048
      %28 = vsyncadd [#allocation6], %s27
      %s29 = sshll.u32 [#allocation5], 4
      %s30 = int_to_ptr.vmem [resolvable:$true] %s29
      %35 = dma.hbm_to_vmem [thread:$0]  %s1, 2048, %s30, [#allocation6], 128, 128, 8
    $region9: #{tpu_custom_call.1} parent=1 // pred_fallthru
      _
    // Predicated region
    $region10: #{tpu_custom_call.1} parent=1 // pred_check
      _
    $region11: #{tpu_custom_call.1} parent=1 // pred_check_branch
      %37 = sbr.rel (0) target = $region13
    $region12: #{tpu_custom_call.1} parent=1 // pred_region
      _
    $region13: #{tpu_custom_call.1} parent=1 // pred_fallthru
      _
    // Predicated region
    $region14: #{tpu_custom_call.1} parent=1 // pred_check
      _
    $region15: #{tpu_custom_call.1} parent=1 // pred_check_branch
      %39 = sbr.rel (0) target = $region17
    $region16: #{tpu_custom_call.1} parent=1 // pred_region
      %40 = dma.done [#allocation3], 128
    $region17: #{tpu_custom_call.1} parent=1 // pred_fallthru
      _
    // Predicated region
    $region18: #{tpu_custom_call.1} parent=1 // pred_check
      _
    $region19: #{tpu_custom_call.1} parent=1 // pred_check_branch
      %42 = sbr.rel (0) target = $region21
    $region20: #{tpu_custom_call.1} parent=1 // pred_region
      %43 = dma.done [#allocation6], 2048
    $region21: #{tpu_custom_call.1} parent=1 // pred_fallthru
      _
    %v44 = vld [vmem:[#allocation2] sm:$0xff]
    %v45 = vld [vmem:[#allocation5] sm:$0xff]
    %v46 = vld [vmem:[#allocation5 + $0x8] sm:$0xff]
    %v47 = vld [vmem:[#allocation5 + $0x10] sm:$0xff]
    %v48 = vld [vmem:[#allocation5 + $0x18] sm:$0xff]
    %v49 = vld [vmem:[#allocation5 + $0x20] sm:$0xff]
    %v50 = vld [vmem:[#allocation5 + $0x28] sm:$0xff]
    %v51 = vld [vmem:[#allocation5 + $0x30] sm:$0xff]
    %v52 = vld [vmem:[#allocation5 + $0x38] sm:$0xff]
    %v53 = vld [vmem:[#allocation5 + $0x40] sm:$0xff]
    %v54 = vld [vmem:[#allocation5 + $0x48] sm:$0xff]
    %v55 = vld [vmem:[#allocation5 + $0x50] sm:$0xff]
    %v56 = vld [vmem:[#allocation5 + $0x58] sm:$0xff]
    %v57 = vld [vmem:[#allocation5 + $0x60] sm:$0xff]
    %v58 = vld [vmem:[#allocation5 + $0x68] sm:$0xff]
    %v59 = vld [vmem:[#allocation5 + $0x70] sm:$0xff]
    %v60 = vld [vmem:[#allocation5 + $0x78] sm:$0xff]
    %v61 = vld [vmem:[%s2] sm:$0x1]
    %v63 = vlaneseq
    %v64 = vshrl.u32 %v63, 7
    %v65 = vsub.s32 0, %v64
    %v66 = vrot.slane %v61, %v65
    %68 = vmatprep.subr.mxu0 0.0
    %69 = vmatpush1.msra.mxu0 %v45
    %70 = vmatprep.subr.mxu0 0.0
    %71 = vmatpush1.msra.mxu0 %v46
    %72 = vmatprep.subr.mxu0 0.0
    %73 = vmatpush1.msra.mxu0 %v47
    %74 = vmatprep.subr.mxu0 0.0
    %75 = vmatpush1.msra.mxu0 %v48
    %76 = vmatprep.subr.mxu0 0.0
    %77 = vmatpush1.msra.mxu0 %v49
    %78 = vmatprep.subr.mxu0 0.0
    %79 = vmatpush1.msra.mxu0 %v50
    %80 = vmatprep.subr.mxu0 0.0
    %81 = vmatpush1.msra.mxu0 %v51
    %82 = vmatprep.subr.mxu0 0.0
    %83 = vmatpush1.msra.mxu0 %v52
    %84 = vmatprep.subr.mxu0 0.0
    %85 = vmatpush1.msra.mxu0 %v53
    %86 = vmatprep.subr.mxu0 0.0
    %87 = vmatpush1.msra.mxu0 %v54
    %88 = vmatprep.subr.mxu0 0.0
    %89 = vmatpush1.msra.mxu0 %v55
    %90 = vmatprep.subr.mxu0 0.0
    %91 = vmatpush1.msra.mxu0 %v56
    %92 = vmatprep.subr.mxu0 0.0
    %93 = vmatpush1.msra.mxu0 %v57
    %94 = vmatprep.subr.mxu0 0.0
    %95 = vmatpush1.msra.mxu0 %v58
    %96 = vmatprep.subr.mxu0 0.0
    %97 = vmatpush1.msra.mxu0 %v59
    %98 = vmatprep.subr.mxu0 0.0
    %99 = vmatpush1.msra.mxu0 %v60
    %100 = vmatprep.subr.mxu0 0.0
    %101 = vmatpush1.msra.mxu0 0.0
    %102 = vmatprep.subr.mxu0 0.0
    %103 = vmatpush1.msra.mxu0 0.0
    %104 = vmatprep.subr.mxu0 0.0
    %105 = vmatpush1.msra.mxu0 0.0
    %106 = vmatprep.subr.mxu0 0.0
    %107 = vmatpush1.msra.mxu0 0.0
    %108 = vmatprep.subr.mxu0 0.0
    %109 = vmatpush1.msra.mxu0 0.0
    %110 = vmatprep.subr.mxu0 0.0
    %111 = vmatpush1.msra.mxu0 0.0
    %112 = vmatprep.subr.mxu0 0.0
    %113 = vmatpush1.msra.mxu0 0.0
    %114 = vmatprep.subr.mxu0 0.0
    %115 = vmatpush1.msra.mxu0 0.0
    %116 = vmatprep.subr.mxu0 0.0
    %117 = vmatpush1.msra.mxu0 0.0
    %118 = vmatprep.subr.mxu0 0.0
    %119 = vmatpush1.msra.mxu0 0.0
    %120 = vmatprep.subr.mxu0 0.0
    %121 = vmatpush1.msra.mxu0 0.0
    %122 = vmatprep.subr.mxu0 0.0
    %123 = vmatpush1.msra.mxu0 0.0
    %124 = vmatprep.subr.mxu0 0.0
    %125 = vmatpush1.msra.mxu0 0.0
    %126 = vmatprep.subr.mxu0 0.0
    %127 = vmatpush1.msra.mxu0 0.0
    %128 = vmatprep.subr.mxu0 0.0
    %129 = vmatpush1.msra.mxu0 0.0
    %130 = vmatprep.subr.mxu0 0.0
    %131 = vmatpush1.msra.mxu0 0.0
    %132 = vmatprep.mubr.f32.mxu0 0.0
    %133 = vmatmul.mubr.f32.gmra.mrb[0].mxu0 %v44
    %v134 = vpop.f32.mrb[0].mxu0
    %v135 = vadd.f32 %v66, %v134
    %v136 = vpop.f32.mrb[0].mxu0
    %137 = vdwg.mxu0
    %138 = vst [vmem:[#allocation7] sm:$0xff] %v135
    %139 = vmax.xlane.f32.xlu0 %v135
    %v140 = vpop.xlane.xlu0 %139
    %v141 = vsub.f32 %v135, %v140
    %v142 = vmul.f32 %v141, 1.442695
    %v143 = vpow.pop %v142
    %144 = vadd.xlane.f32.xlu0 %v143
    %v145 = vpop.xlane.xlu0 %144
    %v146 = vrcp.pop %v145
    %v147 = vmul.f32 %v143, %v146
    %148 = vst [vmem:[#allocation8] sm:$0xff] %v147
    // Predicated region
    $region22: #{tpu_custom_call.1} parent=1 // pred_check
      _
    $region23: #{tpu_custom_call.1} parent=1 // pred_check_branch
      %150 = sbr.rel (0) target = $region25
    $region24: #{tpu_custom_call.1} parent=1 // pred_region
      %s152 = ssub.s32 128, 128
      %153 = vsyncadd [#allocation4], %s152
      %s155 = sshll.u32 [#allocation7], 4
      %s156 = int_to_ptr.vmem [resolvable:$true] %s155
      %158 = dma.vmem_to_hbm [thread:$0]  %s156, 128, %s3, [#allocation4]
    $region25: #{tpu_custom_call.1} parent=1 // pred_fallthru
      _
    // Predicated region
    $region26: #{tpu_custom_call.1} parent=1 // pred_check
      _
    $region27: #{tpu_custom_call.1} parent=1 // pred_check_branch
      %160 = sbr.rel (0) target = $region29
    $region28: #{tpu_custom_call.1} parent=1 // pred_region
      %s162 = ssub.s32 128, 128
      %163 = vsyncadd [#allocation9], %s162
      %s165 = sshll.u32 [#allocation8], 4
      %s166 = int_to_ptr.vmem [resolvable:$true] %s165
      %168 = dma.vmem_to_hbm [thread:$0]  %s166, 128, %s4, [#allocation9]
    $region29: #{tpu_custom_call.1} parent=1 // pred_fallthru
      _
    // Predicated region
    $region30: #{tpu_custom_call.1} parent=1 // pred_check
      _
    $region31: #{tpu_custom_call.1} parent=1 // pred_check_branch
      %170 = sbr.rel (0) target = $region33
    $region32: #{tpu_custom_call.1} parent=1 // pred_region
      %171 = dma.done [#allocation4], 128
    $region33: #{tpu_custom_call.1} parent=1 // pred_fallthru
      _
    // Predicated region
    $region34: #{tpu_custom_call.1} parent=1 // pred_check
      _
    $region35: #{tpu_custom_call.1} parent=1 // pred_check_branch
      %173 = sbr.rel (0) target = $region37
    $region36: #{tpu_custom_call.1} parent=1 // pred_region
      %174 = dma.done [#allocation9], 128
    $region37: #{tpu_custom_call.1} parent=1 // pred_fallthru
      _
    %175 = vsyncpa [#allocation3], 1
    %176 = vsyncpa [#allocation6], 1
    %177 = vsyncpa [#allocation4], 1
    %178 = vsyncpa [#allocation9], 1

</llo_original>
